<compile_context>
chip_gen: v7x
topology: tpu7x:2x2x1
jax: 0.10.0
libtpu: 0.0.40
codegen_flags: <defaults>
</compile_context>

<pallas_src>
import functools

import jax
import jax.numpy as jnp
from jax.experimental import pallas as pl
from jax.experimental.pallas import tpu as pltpu


def _round_up(x, m):
    return ((x + m - 1) // m) * m


def _round_down(x, m):
    return max(m, (x // m) * m)


def _simam_kernel(x_ref, o_ref, *, inv_n, e_lambda):
    """Processes a (TR, HW) tile: one row == one (b, c) channel instance.

    The block's last dim equals the full spatial size, so no lane masking is
    needed.  Tail rows of a partial (cdiv) block contain undefined data, but
    every row is computed independently and out-of-range stores are dropped.
    """
    x = x_ref[...].astype(jnp.float32)
    hw = x.shape[-1]

    # Spatial mean per row, then sum of squared deviations (two-pass form:
    # exact parity with the PyTorch reference, no cancellation issues).
    mean = jnp.sum(x, axis=-1, keepdims=True) * (1.0 / hw)
    d = x - mean
    d2 = d * d
    s = jnp.sum(d2, axis=-1, keepdims=True)

    # One reciprocal per row (instead of hw per-element divides), then a cheap
    # VPU multiply.  approx=False keeps 1e-5 parity with the reference.
    inv = pl.reciprocal(4.0 * (s * inv_n + e_lambda), approx=False)
    y = jax.nn.sigmoid(d2 * inv + 0.5)
    o_ref[...] = (x * y).astype(o_ref.dtype)


def simam(x, e_lambda=1e-4, vmem_budget_bytes=40 * 1024 * 1024):
    """SimAM forward. x: (B, C, H, W) array. Returns same shape/dtype."""
    b, c, h, w = x.shape
    hw = h * w
    bc = b * c
    n = hw - 1
    # Matches the PyTorch reference (which divides by zero for 1x1 maps);
    # guard only against a Python-level ZeroDivisionError at trace time.
    inv_n = (1.0 / n) if n > 0 else float("inf")

    itemsize = jnp.dtype(x.dtype).itemsize
    sublane = {4: 8, 2: 16, 1: 32}.get(itemsize, 8)

    # --- Row-tile sizing from the VMEM budget. -------------------------------
    # Steady-state VMEM per element: double-buffered input + output blocks
    # (itemsize each) plus ~4 f32-wide compute temporaries.
    bytes_per_elem = 4 * itemsize + 16
    max_tile_elems = max(vmem_budget_bytes // bytes_per_elem, sublane * hw)
    tr = max(sublane, _round_down(max_tile_elems // hw, sublane))

    bc_ceil = _round_up(bc, sublane)
    tr = min(tr, bc_ceil)

    # Prefer >= 4 balanced grid steps when there is enough work: gives the
    # pipeline DMA/compute overlap and lets v7x's two TensorCores split the
    # (parallel) row axis.
    min_steps = 4
    if bc_ceil >= min_steps * sublane:
        tr = min(tr, _round_down(pl.cdiv(bc, min_steps), sublane))

    grid = (pl.cdiv(bc, tr),)

    # --- VMEM limit derived from the actual footprint (+ headroom). ----------
    tile_elems = tr * hw
    io_bytes = 4 * tile_elems * itemsize      # 2x in + 2x out (double-buffered)
    tmp_bytes = 4 * tile_elems * 4            # ~4 f32 temporaries in the body
    vmem_limit = max(32 * 1024 * 1024,
                     min(48 * 1024 * 1024,
                         _round_up(io_bytes + tmp_bytes + (8 << 20), 1 << 20)))

    x2d = x.reshape(bc, hw)  # contiguous NCHW -> free metadata reshape

    kernel = functools.partial(_simam_kernel, inv_n=inv_n, e_lambda=e_lambda)

    cost = pl.CostEstimate(
        flops=10 * bc * hw,
        transcendentals=bc * hw,
        bytes_accessed=2 * bc * hw * itemsize,
    )

    out2d = pl.pallas_call(
        kernel,
        out_shape=jax.ShapeDtypeStruct((bc, hw), x.dtype),
        grid_spec=pltpu.PrefetchScalarGridSpec(
            num_scalar_prefetch=0,
            grid=grid,
            in_specs=[pl.BlockSpec((tr, hw), lambda i: (i, 0))],
            out_specs=pl.BlockSpec((tr, hw), lambda i: (i, 0)),
        ),
        compiler_params=pltpu.CompilerParams(
            dimension_semantics=("parallel",),
            vmem_limit_bytes=vmem_limit,
        ),
        cost_estimate=cost,
    )(x2d)

    return out2d.reshape(b, c, h, w)


def simam_reference(x, e_lambda=1e-4):
    """Pure-JAX reference matching the PyTorch forward exactly."""
    b, c, h, w = x.shape
    n = w * h - 1
    x_mean = jnp.mean(x, axis=(2, 3), keepdims=True)
    d2 = jnp.square(x - x_mean)
    s = jnp.sum(d2, axis=(2, 3), keepdims=True)
    y = d2 / (4.0 * (s / n + e_lambda)) + 0.5
    y = jax.nn.sigmoid(y)
    return x * y


if __name__ == "__main__":
    key = jax.random.PRNGKey(0)

    # Primary case: aligned spatial size (H*W multiple of 128).
    B, C, H, W = 2, 4, 16, 16
    x = jax.random.normal(key, (B, C, H, W), dtype=jnp.float32)
    out = jax.block_until_ready(simam(x))
    ref = simam_reference(x)
    assert out.shape == (B, C, H, W)
    assert out.dtype == x.dtype
    assert jnp.allclose(out, ref, atol=1e-5, rtol=1e-5), "mismatch vs reference (16x16)"

    # Secondary case: non-128-multiple spatial size and a non-tile-multiple
    # row count exercise the unpadded full-hw block + partial-row-block path
    # (7x7 feature maps are common for SimAM).
    x2 = jax.random.normal(jax.random.PRNGKey(0), (2, 3, 7, 7), dtype=jnp.float32)
    out2 = jax.block_until_ready(simam(x2))
    ref2 = simam_reference(x2)
    assert out2.shape == (2, 3, 7, 7)
    assert jnp.allclose(out2, ref2, atol=1e-5, rtol=1e-5), "mismatch vs reference (7x7)"

    # Larger case: forces multiple (>=4) grid steps and a partial tail block.
    x3 = jax.random.normal(jax.random.PRNGKey(0), (4, 37, 14, 14), dtype=jnp.float32)
    out3 = jax.block_until_ready(simam(x3))
    ref3 = simam_reference(x3)
    assert jnp.allclose(out3, ref3, atol=1e-5, rtol=1e-5), "mismatch vs reference (14x14)"

    print("KERNEL_OK")
</pallas_src>

<mosaic_0001>
module attributes {stable_mosaic.version = 11 : i64} {
  func.func @_simam_kernel(%arg0: i32, %arg1: memref<8x256xf32, #tpu.memory_space<vmem>>, %arg2: memref<8x256xf32, #tpu.memory_space<vmem>>) attributes {dimension_semantics = [#tpu.dimension_semantics<parallel>], iteration_bounds = array<i64: 1>, scalar_prefetch = 0 : i64, scratch_operands = 0 : i64, tpu.core_type = #tpu.core_type<tc>, window_params = [{transform_indices = @transform_0, window_bounds = array<i64: 8, 256>}, {transform_indices = @transform_1, window_bounds = array<i64: 8, 256>}]} {
    %c0 = arith.constant 0 : index
    %c0_0 = arith.constant 0 : index
    %0 = vector.load %arg1[%c0, %c0_0] : memref<8x256xf32, #tpu.memory_space<vmem>>, vector<8x256xf32>
    %cst = arith.constant dense<0.000000e+00> : vector<8xf32>
    %1 = vector.multi_reduction <add>, %0, %cst [1] : vector<8x256xf32> to vector<8xf32>
    %2 = vector.shape_cast %1 : vector<8xf32> to vector<8x1xf32>
    %cst_1 = arith.constant 3.906250e-03 : f32
    %3 = vector.broadcast %cst_1 : f32 to vector<8x1xf32>
    %4 = arith.mulf %2, %3 : vector<8x1xf32>
    %5 = vector.broadcast %4 : vector<8x1xf32> to vector<8x256xf32>
    %6 = arith.subf %0, %5 : vector<8x256xf32>
    %7 = arith.mulf %6, %6 : vector<8x256xf32>
    %cst_2 = arith.constant dense<0.000000e+00> : vector<8xf32>
    %8 = vector.multi_reduction <add>, %7, %cst_2 [1] : vector<8x256xf32> to vector<8xf32>
    %9 = vector.shape_cast %8 : vector<8xf32> to vector<8x1xf32>
    %cst_3 = arith.constant 0.00392156886 : f32
    %10 = vector.broadcast %cst_3 : f32 to vector<8x1xf32>
    %11 = arith.mulf %9, %10 : vector<8x1xf32>
    %cst_4 = arith.constant 9.99999974E-5 : f32
    %12 = vector.broadcast %cst_4 : f32 to vector<8x1xf32>
    %13 = arith.addf %11, %12 : vector<8x1xf32>
    %cst_5 = arith.constant 4.000000e+00 : f32
    %14 = vector.broadcast %cst_5 : f32 to vector<8x1xf32>
    %15 = arith.mulf %14, %13 : vector<8x1xf32>
    %16 = tpu.reciprocal %15 : vector<8x1xf32> -> vector<8x1xf32>
    %17 = vector.broadcast %16 : vector<8x1xf32> to vector<8x256xf32>
    %18 = arith.mulf %7, %17 : vector<8x256xf32>
    %cst_6 = arith.constant 5.000000e-01 : f32
    %19 = vector.broadcast %cst_6 : f32 to vector<8x256xf32>
    %20 = arith.addf %18, %19 : vector<8x256xf32>
    %21 = arith.negf %20 : vector<8x256xf32>
    %22 = math.exp %21 : vector<8x256xf32>
    %cst_7 = arith.constant 1.000000e+00 : f32
    %23 = vector.broadcast %cst_7 : f32 to vector<8x256xf32>
    %24 = arith.addf %23, %22 : vector<8x256xf32>
    %25 = arith.divf %23, %24 : vector<8x256xf32>
    %26 = arith.mulf %0, %25 : vector<8x256xf32>
    %c0_8 = arith.constant 0 : index
    %c0_9 = arith.constant 0 : index
    %27 = vector.load %arg2[%c0_8, %c0_9] : memref<8x256xf32, #tpu.memory_space<vmem>>, vector<8x256xf32>
    tpu.vector_store %arg2[%c0_8, %c0_9], %26 {strides = array<i32>} : memref<8x256xf32, #tpu.memory_space<vmem>>, vector<8x256xf32>,
    return
  }
  func.func @transform_0(%arg0: i32) -> (i32, i32) {
    %c0_i32 = arith.constant 0 : i32
    %c0_i32_0 = arith.constant 0 : i32
    return %arg0, %c0_i32 : i32, i32
  }
  func.func @transform_1(%arg0: i32) -> (i32, i32) {
    %c0_i32 = arith.constant 0 : i32
    %c0_i32_0 = arith.constant 0 : i32
    return %arg0, %c0_i32 : i32, i32
  }
}

</mosaic_0001>

<llo_original>
// kernel: tpu_custom_call.1
$region0: #{tpu_custom_call.1}
  #allocation0 [shape = 'u32[]', space=smem, size = 0x4, offset = 0x4, fixed_abs, tag = 'smem constant byte address 0x4 - core index']
  #allocation1 [shape = 'u32[144,128]{1,0:T(1,128)}', space=vmem, size = 0x12000, scoped, tag = 'internal scratch']
  %s0 = inlined_call_operand.hbm [shape: f32[8,256], index: 0, kind: input, shape index: {}]
  %s1 = inlined_call_operand.hbm [shape: f32[8,256], index: 1, kind: output, shape index: {}]
  %s2 = sld [smem:[#allocation0]]
  $region18: #{tpu_custom_call.1} parent=0
    _
  %s4 = ssub.s32 1, %s2
  %s5 = scalar_select 0, %s4, %s2
  $region1: #{tpu_custom_call.1} parent=0
    #allocation2 [shape = 'u8[8192]{0}', space=vmem, size = 0x2000, scoped, tag = 'input window, operand 0, single buffered']
    #allocation3 [shape = 's32[1]{0}', space=sflag, size = 0x4, scoped, tag = 'scoped memory for tpu_custom_call.1']
    #allocation4 [shape = 's32[1]{0}', space=sflag, size = 0x4, scoped, tag = 'scoped memory for tpu_custom_call.1']
    #allocation5 [shape = 'u8[8192]{0}', space=vmem, size = 0x2000, scoped, tag = 'output window, operand 0, single buffered']
    %6 = vsyncpa [#allocation3], 0
    %7 = vsyncpa [#allocation4], 0
    // Predicated region
    $region2: #{tpu_custom_call.1} parent=1 // pred_check
      _
    $region3: #{tpu_custom_call.1} parent=1 // pred_check_branch
      %9 = sbr.rel (0) target = $region5
    $region4: #{tpu_custom_call.1} parent=1 // pred_region
      %s11 = ssub.s32 256, 256
      %12 = vsyncadd [#allocation3], %s11
      %s14 = sshll.u32 [#allocation2], 4
      %s15 = int_to_ptr.vmem [resolvable:$true] %s14
      %17 = dma.hbm_to_vmem [thread:$0]  %s0, 256, %s15, [#allocation3]
    $region5: #{tpu_custom_call.1} parent=1 // pred_fallthru
      _
    // Predicated region
    $region6: #{tpu_custom_call.1} parent=1 // pred_check
      _
    $region7: #{tpu_custom_call.1} parent=1 // pred_check_branch
      %19 = sbr.rel (0) target = $region9
    $region8: #{tpu_custom_call.1} parent=1 // pred_region
      %20 = dma.done [#allocation3], 256
    $region9: #{tpu_custom_call.1} parent=1 // pred_fallthru
      _
    %v21 = vld [vmem:[#allocation2] sm:$0xff]
    %v22 = vld [vmem:[#allocation2 + $0x8] sm:$0xff]
    %v23 = vadd.f32 %v21, %v22
    %24 = vadd.xlane.f32.xlu0 %v23
    %v25 = vpop.xlane.xlu0 %24
    %v26 = vmul.f32 %v25, 0.00390625
    %v27 = vsub.f32 %v21, %v26
    %v28 = vsub.f32 %v22, %v26
    %v29 = vmul.f32 %v27, %v27
    %v30 = vmul.f32 %v28, %v28
    %v31 = vadd.f32 %v29, %v30
    %32 = vadd.xlane.f32.xlu0 %v31
    %v33 = vpop.xlane.xlu0 %32
    %v34 = vmul.f32 %v33, 0.003921569
    %v35 = vadd.f32 %v34, 0.0001
    %v36 = vmul.f32 %v35, 4.0
    %v37 = vrcp.pop %v36
    %v38 = vmul.f32 %v29, %v37
    %v39 = vmul.f32 %v30, %v37
    %v40 = vadd.f32 %v38, 0.5
    %v41 = vadd.f32 %v39, 0.5
    %v42 = vxor.u32 %v40, 2147483648
    %v43 = vxor.u32 %v41, 2147483648
    %v44 = vmul.f32 %v42, 1.442695
    %v45 = vpow.pop %v44
    %v46 = vmul.f32 %v43, 1.442695
    %v47 = vpow.pop %v46
    %v48 = vadd.f32 %v45, 1.0
    %v49 = vadd.f32 %v47, 1.0
    %v50 = vrcp.pop %v48
    %v51 = vmul.f32 1.0, %v50
    %v52 = vrcp.pop %v49
    %v53 = vmul.f32 1.0, %v52
    %v54 = vmul.f32 %v21, %v51
    %v55 = vmul.f32 %v22, %v53
    %56 = vst [vmem:[#allocation5] sm:$0xff] %v54
    %57 = vst [vmem:[#allocation5 + $0x8] sm:$0xff] %v55
    // Predicated region
    $region10: #{tpu_custom_call.1} parent=1 // pred_check
      _
    $region11: #{tpu_custom_call.1} parent=1 // pred_check_branch
      %59 = sbr.rel (0) target = $region13
    $region12: #{tpu_custom_call.1} parent=1 // pred_region
      %s61 = ssub.s32 256, 256
      %62 = vsyncadd [#allocation4], %s61
      %s64 = sshll.u32 [#allocation5], 4
      %s65 = int_to_ptr.vmem [resolvable:$true] %s64
      %67 = dma.vmem_to_hbm [thread:$0]  %s65, 256, %s1, [#allocation4]
    $region13: #{tpu_custom_call.1} parent=1 // pred_fallthru
      _
    // Predicated region
    $region14: #{tpu_custom_call.1} parent=1 // pred_check
      _
    $region15: #{tpu_custom_call.1} parent=1 // pred_check_branch
      %69 = sbr.rel (0) target = $region17
    $region16: #{tpu_custom_call.1} parent=1 // pred_region
      %70 = dma.done [#allocation4], 256
    $region17: #{tpu_custom_call.1} parent=1 // pred_fallthru
      _
    %71 = vsyncpa [#allocation3], 1
    %72 = vsyncpa [#allocation4], 1

</llo_original>
